<compile_context>
chip_gen: v6e
topology: v6e:2x2x1
jax: 0.10.0
libtpu: 0.0.40
codegen_flags: <defaults>
</compile_context>

<pallas_src>
import functools

import jax
import jax.numpy as jnp
from jax.experimental import pallas as pl
from jax.experimental.pallas import tpu as pltpu


def _round_up(n: int, m: int) -> int:
    return ((n + m - 1) // m) * m


def dqn_mlp_kernel(x_ref, w1_ref, b1_ref, w2_ref, b2_ref, w3_ref, b3_ref, o_ref):
    # fc1 + relu (K = true in_dim, no feature padding on x; f32 accumulation).
    h1 = jnp.dot(x_ref[...], w1_ref[...], preferred_element_type=jnp.float32)
    h1 = jnp.maximum(h1 + b1_ref[...], 0.0).astype(w2_ref.dtype)
    # fc2 + relu
    h2 = jnp.dot(h1, w2_ref[...], preferred_element_type=jnp.float32)
    h2 = jnp.maximum(h2 + b2_ref[...], 0.0).astype(w3_ref.dtype)
    # fc3 (no activation); 128-lane-padded, unmasked store
    o = jnp.dot(h2, w3_ref[...], preferred_element_type=jnp.float32)
    o_ref[...] = (o + b3_ref[...]).astype(o_ref.dtype)


def prepare_params(params, compute_dtype=jnp.bfloat16):
    """One-time layout/dtype preparation (hoisted out of the per-call path).

    params: dict with w{1,2,3} stored [in, out] (transpose of nn.Linear) and
    b{1,2,3} stored [1, out].  Returns (prepared_params, dims)."""
    w1, b1 = params["w1"], params["b1"]
    w2, b2 = params["w2"], params["b2"]
    w3, b3 = params["w3"], params["b3"]
    in_dim, hid = w1.shape
    out_dim = w3.shape[1]
    hid_p = _round_up(hid, 128)
    out_p = _round_up(out_dim, 128)

    pad2 = lambda a, r, c: jnp.pad(a, ((0, r - a.shape[0]), (0, c - a.shape[1])))

    prepared = {
        # w1 keeps exactly in_dim rows so the first matmul's K matches the
        # UNPADDED x feature dim.  Column zero-padding (to hid_p/out_p) is exact:
        # padded output columns are zero and get sliced off.
        "w1": pad2(w1, in_dim, hid_p).astype(compute_dtype),
        "w2": pad2(w2, hid_p, hid_p).astype(compute_dtype),
        "w3": pad2(w3, hid_p, out_p).astype(compute_dtype),
        # Biases stay f32: added to the f32 MXU accumulator.
        "b1": pad2(b1, 1, hid_p).astype(jnp.float32),
        "b2": pad2(b2, 1, hid_p).astype(jnp.float32),
        "b3": pad2(b3, 1, out_p).astype(jnp.float32),
    }
    dims = dict(in_dim=in_dim, hid=hid, out_dim=out_dim, hid_p=hid_p, out_p=out_p)
    return prepared, dims


def dqn_forward(x, prepared, dims, *, batch_tile_cap=256, min_grid_steps=1,
                out_dtype=jnp.float32, compute_dtype=jnp.bfloat16):
    """x: [B, input_dim] float32.  prepared/dims from prepare_params().
    Returns [B, output_dim] in out_dtype (default float32).

    batch_tile_cap=256 bounds the fused f32 intermediates (vreg pressure on v5e);
    single-TC chips (v5e/v6e) can raise it, v7x should pass min_grid_steps=2 so the
    parallel batch axis is sharded across both TensorCores."""
    B, in_dim = x.shape
    assert in_dim == dims["in_dim"], "x feature dim does not match params"
    hid_p, out_p, out_dim = dims["hid_p"], dims["out_p"], dims["out_dim"]

    # Batch tiling: waste < 1 tile, 16-row aligned (bf16 sublane packing).
    n_tiles = max(pl.cdiv(B, batch_tile_cap), min_grid_steps)
    batch_tile = _round_up(pl.cdiv(B, n_tiles), 16)
    B_p = _round_up(B, batch_tile)
    grid = (B_p // batch_tile,)

    x_p = x.astype(compute_dtype)
    if B_p != B:
        # Only the batch axis is padded (zero rows -> relu(bias) garbage, sliced off).
        x_p = jnp.pad(x_p, ((0, B_p - B), (0, 0)))

    full = lambda shape: pl.BlockSpec(shape, lambda i, _s=shape: (0,) * len(_s))

    # Explicit VMEM budget: double-buffered x/out tiles + resident (double-buffered)
    # weights + biases + slack for the fused f32 intermediates.
    it = jnp.dtype(compute_dtype).itemsize
    vmem_bytes = (
        2 * batch_tile * in_dim * it
        + 2 * batch_tile * out_p * jnp.dtype(out_dtype).itemsize
        + 2 * (in_dim * hid_p + hid_p * hid_p + hid_p * out_p) * it
        + 2 * (2 * hid_p + out_p) * 4
        + (4 << 20))
    vmem_bytes = min(max(_round_up(vmem_bytes, 1 << 20), 8 << 20), 32 << 20)

    out_padded = pl.pallas_call(
        dqn_mlp_kernel,
        out_shape=jax.ShapeDtypeStruct((B_p, out_p), out_dtype),
        grid_spec=pl.GridSpec(
            grid=grid,
            in_specs=[
                # x tile: last dim equals the full (unpadded) feature dim -> legal
                # BlockSpec, no lane padding, 8x fewer input bytes.
                pl.BlockSpec((batch_tile, in_dim), lambda i: (i, 0)),
                full((in_dim, hid_p)),   # w1 (resident: constant index_map)
                full((1, hid_p)),        # b1
                full((hid_p, hid_p)),    # w2
                full((1, hid_p)),        # b2
                full((hid_p, out_p)),    # w3
                full((1, out_p)),        # b3
            ],
            out_specs=pl.BlockSpec((batch_tile, out_p), lambda i: (i, 0)),
        ),
        compiler_params=pltpu.CompilerParams(
            dimension_semantics=("parallel",),
            vmem_limit_bytes=vmem_bytes),
    )(x_p, prepared["w1"], prepared["b1"], prepared["w2"], prepared["b2"],
      prepared["w3"], prepared["b3"])

    return out_padded[:B, :out_dim]


def init_params(key, input_dim, hidden_dim, output_dim):
    """PyTorch-style uniform fan-in init; weights stored [in, out] (transpose of
    nn.Linear's [out, in]), biases [1, out]."""
    ks = jax.random.split(key, 6)

    def lin(kw, kb, fan_in, fan_out):
        bound = 1.0 / jnp.sqrt(fan_in)
        w = jax.random.uniform(kw, (fan_in, fan_out), jnp.float32, -bound, bound)
        b = jax.random.uniform(kb, (1, fan_out), jnp.float32, -bound, bound)
        return w, b

    w1, b1 = lin(ks[0], ks[1], input_dim, hidden_dim)
    w2, b2 = lin(ks[2], ks[3], hidden_dim, hidden_dim)
    w3, b3 = lin(ks[4], ks[5], hidden_dim, output_dim)
    return {"w1": w1, "b1": b1, "w2": w2, "b2": b2, "w3": w3, "b3": b3}


def reference_forward_f32(x, p):
    h1 = jnp.maximum(x @ p["w1"] + p["b1"], 0.0)
    h2 = jnp.maximum(h1 @ p["w2"] + p["b2"], 0.0)
    return h2 @ p["w3"] + p["b3"]


def reference_forward_bf16(x, p):
    """Same bf16-operand / f32-accumulate path as the kernel, for tight validation."""
    bf = jnp.bfloat16
    h1 = jnp.maximum(jnp.dot(x.astype(bf), p["w1"].astype(bf),
                             preferred_element_type=jnp.float32) + p["b1"], 0.0)
    h2 = jnp.maximum(jnp.dot(h1.astype(bf), p["w2"].astype(bf),
                             preferred_element_type=jnp.float32) + p["b2"], 0.0)
    return jnp.dot(h2.astype(bf), p["w3"].astype(bf),
                   preferred_element_type=jnp.float32) + p["b3"]


if __name__ == "__main__":
    key = jax.random.PRNGKey(0)
    k_x, k_p = jax.random.split(key)

    batch, input_dim, hidden_dim, output_dim = 8, 16, 32, 4
    x = jax.random.normal(k_x, (batch, input_dim), jnp.float32)
    params = init_params(k_p, input_dim, hidden_dim, output_dim)

    # One-time kernel-layout prep (cached and reused across every forward call).
    prepared, dims = prepare_params(params)

    fwd = jax.jit(lambda xx, pp: dqn_forward(xx, pp, dims))
    out = jax.block_until_ready(fwd(x, prepared))
    assert out.shape == (batch, output_dim)
    assert out.dtype == jnp.float32

    # Tight check vs. the matching bf16-compute / f32-accumulate reference,
    # loose check vs. the pure-f32 reference (bf16 weight quantization drift).
    ref_bf16 = reference_forward_bf16(x, params)
    ref_f32 = reference_forward_f32(x, params)
    assert jnp.allclose(out, ref_bf16, atol=1e-3, rtol=1e-3), "mismatch vs. bf16-path reference"
    assert jnp.allclose(out, ref_f32, atol=3e-2, rtol=3e-2), "mismatch vs. f32 reference"

    print("KERNEL_OK")
</pallas_src>

<mosaic_0001>
module attributes {stable_mosaic.version = 11 : i64} {
  func.func @dqn_mlp_kernel(%arg0: i32, %arg1: memref<16x16xbf16, #tpu.memory_space<vmem>>, %arg2: memref<16x128xbf16, #tpu.memory_space<vmem>>, %arg3: memref<1x128xf32, #tpu.memory_space<vmem>>, %arg4: memref<128x128xbf16, #tpu.memory_space<vmem>>, %arg5: memref<1x128xf32, #tpu.memory_space<vmem>>, %arg6: memref<128x128xbf16, #tpu.memory_space<vmem>>, %arg7: memref<1x128xf32, #tpu.memory_space<vmem>>, %arg8: memref<16x128xf32, #tpu.memory_space<vmem>>) attributes {dimension_semantics = [#tpu.dimension_semantics<parallel>], iteration_bounds = array<i64: 1>, scalar_prefetch = 0 : i64, scratch_operands = 0 : i64, tpu.core_type = #tpu.core_type<tc>, window_params = [{transform_indices = @transform_0, window_bounds = array<i64: 16, 16>}, {pipeline_mode = #tpu.pipeline_mode<synchronous>, transform_indices = @transform_1, window_bounds = array<i64: 16, 128>}, {pipeline_mode = #tpu.pipeline_mode<synchronous>, transform_indices = @transform_2, window_bounds = array<i64: 1, 128>}, {pipeline_mode = #tpu.pipeline_mode<synchronous>, transform_indices = @transform_3, window_bounds = array<i64: 128, 128>}, {pipeline_mode = #tpu.pipeline_mode<synchronous>, transform_indices = @transform_4, window_bounds = array<i64: 1, 128>}, {pipeline_mode = #tpu.pipeline_mode<synchronous>, transform_indices = @transform_5, window_bounds = array<i64: 128, 128>}, {pipeline_mode = #tpu.pipeline_mode<synchronous>, transform_indices = @transform_6, window_bounds = array<i64: 1, 128>}, {transform_indices = @transform_7, window_bounds = array<i64: 16, 128>}]} {
    %c0 = arith.constant 0 : index
    %c0_0 = arith.constant 0 : index
    %0 = vector.load %arg1[%c0, %c0_0] : memref<16x16xbf16, #tpu.memory_space<vmem>>, vector<16x16xbf16>
    %c0_1 = arith.constant 0 : index
    %c0_2 = arith.constant 0 : index
    %1 = vector.load %arg2[%c0_1, %c0_2] : memref<16x128xbf16, #tpu.memory_space<vmem>>, vector<16x128xbf16>
    %cst = arith.constant dense<0.000000e+00> : vector<16x128xf32>
    %2 = tpu.matmul %0, %1, %cst {dimension_numbers = #tpu.dot_dimension_numbers<[1], [0], [0], [1], [0, 0, 1, 1], [], []>} : vector<16x16xbf16>, vector<16x128xbf16>, vector<16x128xf32> -> vector<16x128xf32>
    %c0_3 = arith.constant 0 : index
    %c0_4 = arith.constant 0 : index
    %3 = vector.load %arg3[%c0_3, %c0_4] : memref<1x128xf32, #tpu.memory_space<vmem>>, vector<1x128xf32>
    %4 = vector.broadcast %3 : vector<1x128xf32> to vector<16x128xf32>
    %5 = arith.addf %2, %4 : vector<16x128xf32>
    %cst_5 = arith.constant 0.000000e+00 : f32
    %6 = vector.broadcast %cst_5 : f32 to vector<16x128xf32>
    %7 = arith.maximumf %5, %6 : vector<16x128xf32>
    %8 = arith.truncf %7 : vector<16x128xf32> to vector<16x128xbf16>
    %c0_6 = arith.constant 0 : index
    %c0_7 = arith.constant 0 : index
    %9 = vector.load %arg4[%c0_6, %c0_7] : memref<128x128xbf16, #tpu.memory_space<vmem>>, vector<128x128xbf16>
    %cst_8 = arith.constant dense<0.000000e+00> : vector<16x128xf32>
    %10 = tpu.matmul %8, %9, %cst_8 {dimension_numbers = #tpu.dot_dimension_numbers<[1], [0], [0], [1], [0, 0, 1, 1], [], []>} : vector<16x128xbf16>, vector<128x128xbf16>, vector<16x128xf32> -> vector<16x128xf32>
    %c0_9 = arith.constant 0 : index
    %c0_10 = arith.constant 0 : index
    %11 = vector.load %arg5[%c0_9, %c0_10] : memref<1x128xf32, #tpu.memory_space<vmem>>, vector<1x128xf32>
    %12 = vector.broadcast %11 : vector<1x128xf32> to vector<16x128xf32>
    %13 = arith.addf %10, %12 : vector<16x128xf32>
    %cst_11 = arith.constant 0.000000e+00 : f32
    %14 = vector.broadcast %cst_11 : f32 to vector<16x128xf32>
    %15 = arith.maximumf %13, %14 : vector<16x128xf32>
    %16 = arith.truncf %15 : vector<16x128xf32> to vector<16x128xbf16>
    %c0_12 = arith.constant 0 : index
    %c0_13 = arith.constant 0 : index
    %17 = vector.load %arg6[%c0_12, %c0_13] : memref<128x128xbf16, #tpu.memory_space<vmem>>, vector<128x128xbf16>
    %cst_14 = arith.constant dense<0.000000e+00> : vector<16x128xf32>
    %18 = tpu.matmul %16, %17, %cst_14 {dimension_numbers = #tpu.dot_dimension_numbers<[1], [0], [0], [1], [0, 0, 1, 1], [], []>} : vector<16x128xbf16>, vector<128x128xbf16>, vector<16x128xf32> -> vector<16x128xf32>
    %c0_15 = arith.constant 0 : index
    %c0_16 = arith.constant 0 : index
    %19 = vector.load %arg7[%c0_15, %c0_16] : memref<1x128xf32, #tpu.memory_space<vmem>>, vector<1x128xf32>
    %20 = vector.broadcast %19 : vector<1x128xf32> to vector<16x128xf32>
    %21 = arith.addf %18, %20 : vector<16x128xf32>
    %c0_17 = arith.constant 0 : index
    %c0_18 = arith.constant 0 : index
    %22 = vector.load %arg8[%c0_17, %c0_18] : memref<16x128xf32, #tpu.memory_space<vmem>>, vector<16x128xf32>
    tpu.vector_store %arg8[%c0_17, %c0_18], %21 {strides = array<i32>} : memref<16x128xf32, #tpu.memory_space<vmem>>, vector<16x128xf32>,
    return
  }
  func.func @transform_0(%arg0: i32) -> (i32, i32) {
    %c0_i32 = arith.constant 0 : i32
    %c0_i32_0 = arith.constant 0 : i32
    return %arg0, %c0_i32 : i32, i32
  }
  func.func @transform_1(%arg0: i32) -> (i32, i32) {
    %c0_i32 = arith.constant 0 : i32
    %c0_i32_0 = arith.constant 0 : i32
    %c0_i32_1 = arith.constant 0 : i32
    return %c0_i32, %c0_i32_0 : i32, i32
  }
  func.func @transform_2(%arg0: i32) -> (i32, i32) {
    %c0_i32 = arith.constant 0 : i32
    %c0_i32_0 = arith.constant 0 : i32
    %c0_i32_1 = arith.constant 0 : i32
    return %c0_i32, %c0_i32_0 : i32, i32
  }
  func.func @transform_3(%arg0: i32) -> (i32, i32) {
    %c0_i32 = arith.constant 0 : i32
    %c0_i32_0 = arith.constant 0 : i32
    %c0_i32_1 = arith.constant 0 : i32
    return %c0_i32, %c0_i32_0 : i32, i32
  }
  func.func @transform_4(%arg0: i32) -> (i32, i32) {
    %c0_i32 = arith.constant 0 : i32
    %c0_i32_0 = arith.constant 0 : i32
    %c0_i32_1 = arith.constant 0 : i32
    return %c0_i32, %c0_i32_0 : i32, i32
  }
  func.func @transform_5(%arg0: i32) -> (i32, i32) {
    %c0_i32 = arith.constant 0 : i32
    %c0_i32_0 = arith.constant 0 : i32
    %c0_i32_1 = arith.constant 0 : i32
    return %c0_i32, %c0_i32_0 : i32, i32
  }
  func.func @transform_6(%arg0: i32) -> (i32, i32) {
    %c0_i32 = arith.constant 0 : i32
    %c0_i32_0 = arith.constant 0 : i32
    %c0_i32_1 = arith.constant 0 : i32
    return %c0_i32, %c0_i32_0 : i32, i32
  }
  func.func @transform_7(%arg0: i32) -> (i32, i32) {
    %c0_i32 = arith.constant 0 : i32
    %c0_i32_0 = arith.constant 0 : i32
    return %arg0, %c0_i32 : i32, i32
  }
}

</mosaic_0001>

<llo_original>
// kernel: _lambda_.1
$region0: #{_lambda_.1}
  #allocation0 [shape = 'u32[]', space=smem, size = 0x4, offset = 0x4, fixed_abs, tag = 'smem constant byte address 0x4 - core index']
  #allocation1 [shape = 'u32[144,128]{1,0:T(1,128)}', space=vmem, size = 0x12000, scoped, tag = 'internal scratch']
  %s0 = inlined_call_operand.vmem [shape: bf16[16,16], index: 0, kind: input, shape index: {}]
  %s1 = inlined_call_operand.vmem [shape: bf16[16,128], index: 1, kind: input, shape index: {}]
  %s2 = inlined_call_operand.vmem [shape: f32[1,128], index: 2, kind: input, shape index: {}]
  %s3 = inlined_call_operand.hbm [shape: bf16[128,128], index: 3, kind: input, shape index: {}]
  %s4 = inlined_call_operand.vmem [shape: f32[1,128], index: 4, kind: input, shape index: {}]
  %s5 = inlined_call_operand.hbm [shape: bf16[128,128], index: 5, kind: input, shape index: {}]
  %s6 = inlined_call_operand.vmem [shape: f32[1,128], index: 6, kind: input, shape index: {}]
  %s7 = inlined_call_operand.vmem [shape: f32[16,128], index: 7, kind: output, shape index: {}]
  %s8 = sld [smem:[#allocation0]]
  $region46: #{_lambda_.1} parent=0
    _
  %s10 = ssub.s32 1, %s8
  %s11 = scalar_select 0, %s10, %s8
  $region1: #{_lambda_.1} parent=0
    #allocation2 [shape = 'u8[32768]{0}', space=vmem, size = 0x8000, scoped, tag = 'input window, operand 3, single buffered']
    #allocation3 [shape = 's32[1]{0}', space=sflag, size = 0x4, scoped, tag = 'scoped memory for _lambda_.1']
    #allocation4 [shape = 'u8[32768]{0}', space=vmem, size = 0x8000, scoped, tag = 'input window, operand 5, single buffered']
    #allocation5 [shape = 's32[1]{0}', space=sflag, size = 0x4, scoped, tag = 'scoped memory for _lambda_.1']
    %12 = vsyncpa [#allocation3], 0
    %13 = vsyncpa [#allocation5], 0
    // Predicated region
    $region2: #{_lambda_.1} parent=1 // pred_check
      _
    $region3: #{_lambda_.1} parent=1 // pred_check_branch
      %15 = sbr.rel (0) target = $region5
    $region4: #{_lambda_.1} parent=1 // pred_region
      _
    $region5: #{_lambda_.1} parent=1 // pred_fallthru
      _
    // Predicated region
    $region6: #{_lambda_.1} parent=1 // pred_check
      _
    $region7: #{_lambda_.1} parent=1 // pred_check_branch
      %17 = sbr.rel (0) target = $region9
    $region8: #{_lambda_.1} parent=1 // pred_region
      _
    $region9: #{_lambda_.1} parent=1 // pred_fallthru
      _
    // Predicated region
    $region10: #{_lambda_.1} parent=1 // pred_check
      _
    $region11: #{_lambda_.1} parent=1 // pred_check_branch
      %19 = sbr.rel (0) target = $region13
    $region12: #{_lambda_.1} parent=1 // pred_region
      _
    $region13: #{_lambda_.1} parent=1 // pred_fallthru
      _
    // Predicated region
    $region14: #{_lambda_.1} parent=1 // pred_check
      _
    $region15: #{_lambda_.1} parent=1 // pred_check_branch
      %21 = sbr.rel (0) target = $region17
    $region16: #{_lambda_.1} parent=1 // pred_region
      %s23 = ssub.s32 1024, 1024
      %24 = vsyncadd [#allocation3], %s23
      %s25 = sshll.u32 [#allocation2], 4
      %s26 = int_to_ptr.vmem [resolvable:$true] %s25
      %31 = dma.hbm_to_vmem [thread:$0]  %s3, 1024, %s26, [#allocation3], 64, 64, 4
    $region17: #{_lambda_.1} parent=1 // pred_fallthru
      _
    // Predicated region
    $region18: #{_lambda_.1} parent=1 // pred_check
      _
    $region19: #{_lambda_.1} parent=1 // pred_check_branch
      %33 = sbr.rel (0) target = $region21
    $region20: #{_lambda_.1} parent=1 // pred_region
      _
    $region21: #{_lambda_.1} parent=1 // pred_fallthru
      _
    // Predicated region
    $region22: #{_lambda_.1} parent=1 // pred_check
      _
    $region23: #{_lambda_.1} parent=1 // pred_check_branch
      %35 = sbr.rel (0) target = $region25
    $region24: #{_lambda_.1} parent=1 // pred_region
      %s37 = ssub.s32 1024, 1024
      %38 = vsyncadd [#allocation5], %s37
      %s39 = sshll.u32 [#allocation4], 4
      %s40 = int_to_ptr.vmem [resolvable:$true] %s39
      %45 = dma.hbm_to_vmem [thread:$0]  %s5, 1024, %s40, [#allocation5], 64, 64, 4
    $region25: #{_lambda_.1} parent=1 // pred_fallthru
      _
    // Predicated region
    $region26: #{_lambda_.1} parent=1 // pred_check
      _
    $region27: #{_lambda_.1} parent=1 // pred_check_branch
      %47 = sbr.rel (0) target = $region29
    $region28: #{_lambda_.1} parent=1 // pred_region
      _
    $region29: #{_lambda_.1} parent=1 // pred_fallthru
      _
    // Predicated region
    $region30: #{_lambda_.1} parent=1 // pred_check
      _
    $region31: #{_lambda_.1} parent=1 // pred_check_branch
      %49 = sbr.rel (0) target = $region33
    $region32: #{_lambda_.1} parent=1 // pred_region
      %50 = dma.done [#allocation3], 1024
    $region33: #{_lambda_.1} parent=1 // pred_fallthru
      _
    // Predicated region
    $region34: #{_lambda_.1} parent=1 // pred_check
      _
    $region35: #{_lambda_.1} parent=1 // pred_check_branch
      %52 = sbr.rel (0) target = $region37
    $region36: #{_lambda_.1} parent=1 // pred_region
      %53 = dma.done [#allocation5], 1024
    $region37: #{_lambda_.1} parent=1 // pred_fallthru
      _
    %v55 = vld [vmem:[%s0] sm:$0xf]
    %v56 = vld [vmem:[%s0 + $0x4] sm:$0xf]
    %v57 = vld [vmem:[%s1] sm:$0xf]
    %v58 = vld [vmem:[%s1 + $0x4] sm:$0xf]
    %v59 = vld [vmem:[%s2] sm:$0x1]
    %v61 = vlaneseq
    %v62 = vshrl.u32 %v61, 7
    %v63 = vsub.s32 0, %v62
    %v64 = vrot.slane %v59, %v63
    %v68 = vunpack.c.l.b16 %v55
    %v69 = vunpack.c.l.b16 %v56
    %v70 = vpack.c.b16 %v69, %v68
    %v73 = vunpack.c.l.b16 %v57
    %v74 = vunpack.c.l.b16 %v58
    %v75 = vpack.c.b16 %v74, %v73
    %vm77 = vcmask 130048
    %v79 = vsel %vm77, %v70, 0
    %81 = vmatprep.subr.bf16.mxu0 0
    %82 = vmatpush1.bf16.msra.mxu0 0
    %83 = vmatprep.subr.bf16.mxu0 0
    %84 = vmatpush1.bf16.msra.mxu0 0
    %85 = vmatprep.subr.bf16.mxu0 0
    %86 = vmatpush1.bf16.msra.mxu0 0
    %87 = vmatprep.subr.bf16.mxu0 0
    %88 = vmatpush1.bf16.msra.mxu0 0
    %89 = vmatprep.subr.bf16.mxu0 0
    %90 = vmatpush1.bf16.msra.mxu0 0
    %91 = vmatprep.subr.bf16.mxu0 0
    %92 = vmatpush1.bf16.msra.mxu0 0
    %93 = vmatprep.subr.bf16.mxu0 0
    %94 = vmatpush1.bf16.msra.mxu0 0
    %95 = vmatprep.subr.bf16.mxu0 0
    %96 = vmatpush1.bf16.msra.mxu0 %v75
    %97 = vmatprep.subr.bf16.mxu0 0
    %98 = vmatpush2.bf16.msra.mxu0 0
    %99 = vmatprep.subr.bf16.mxu0 0
    %100 = vmatpush2.bf16.msra.mxu0 0
    %101 = vmatprep.subr.bf16.mxu0 0
    %102 = vmatpush2.bf16.msra.mxu0 0
    %103 = vmatprep.subr.bf16.mxu0 0
    %104 = vmatpush2.bf16.msra.mxu0 0
    %105 = vmatprep.subr.bf16.mxu0 0
    %106 = vmatpush2.bf16.msra.mxu0 0
    %107 = vmatprep.subr.bf16.mxu0 0
    %108 = vmatpush2.bf16.msra.mxu0 0
    %109 = vmatprep.subr.bf16.mxu0 0
    %110 = vmatpush2.bf16.msra.mxu0 0
    %111 = vmatprep.subr.bf16.mxu0 0
    %112 = vmatpush2.bf16.msra.mxu0 0
    %113 = vmatprep.mubr.bf16.mxu0 0
    %114 = vmatmul.mubr.bf16.gmra.mxu0 %v79
    %v115 = vpop.f32.mrf.mxu0
    %v116 = vadd.f32 %v64, %v115
    %v117 = vpop.f32.mrf.mxu0
    %v118 = vpop.f32.mrf.mxu0
    %v119 = vadd.f32 %v64, %v118
    %v120 = vpop.f32.mrf.mxu0
    %121 = vdwg.mxu0
    %v122 = vmax.f32 %v116, 0.0
    %v123 = vmax.f32 %v119, 0.0
    %v124 = vpack.c.bf16 %v123, %v122
    %v125 = vld [vmem:[#allocation2] sm:$0xf]
    %v126 = vld [vmem:[#allocation2 + $0x4] sm:$0xf]
    %v127 = vld [vmem:[#allocation2 + $0x8] sm:$0xf]
    %v128 = vld [vmem:[#allocation2 + $0xc] sm:$0xf]
    %v129 = vld [vmem:[#allocation2 + $0x10] sm:$0xf]
    %v130 = vld [vmem:[#allocation2 + $0x14] sm:$0xf]
    %v131 = vld [vmem:[#allocation2 + $0x18] sm:$0xf]
    %v132 = vld [vmem:[#allocation2 + $0x1c] sm:$0xf]
    %v133 = vld [vmem:[#allocation2 + $0x20] sm:$0xf]
    %v134 = vld [vmem:[#allocation2 + $0x24] sm:$0xf]
    %v135 = vld [vmem:[#allocation2 + $0x28] sm:$0xf]
    %v136 = vld [vmem:[#allocation2 + $0x2c] sm:$0xf]
    %v137 = vld [vmem:[#allocation2 + $0x30] sm:$0xf]
    %v138 = vld [vmem:[#allocation2 + $0x34] sm:$0xf]
    %v139 = vld [vmem:[#allocation2 + $0x38] sm:$0xf]
    %v140 = vld [vmem:[#allocation2 + $0x3c] sm:$0xf]
    %v141 = vld [vmem:[%s4] sm:$0x1]
    %v143 = vlaneseq
    %v144 = vshrl.u32 %v143, 7
    %v145 = vsub.s32 0, %v144
    %v146 = vrot.slane %v141, %v145
    %v164 = vunpack.c.l.b16 %v125
    %v165 = vunpack.c.l.b16 %v126
    %v166 = vunpack.c.l.b16 %v127
    %v167 = vunpack.c.l.b16 %v128
    %v168 = vunpack.c.l.b16 %v129
    %v169 = vunpack.c.l.b16 %v130
    %v170 = vunpack.c.l.b16 %v131
    %v171 = vunpack.c.l.b16 %v132
    %v172 = vunpack.c.l.b16 %v133
    %v173 = vunpack.c.l.b16 %v134
    %v174 = vunpack.c.l.b16 %v135
    %v175 = vunpack.c.l.b16 %v136
    %v176 = vunpack.c.l.b16 %v137
    %v177 = vunpack.c.l.b16 %v138
    %v178 = vunpack.c.l.b16 %v139
    %v179 = vunpack.c.l.b16 %v140
    %v180 = vpack.c.b16 %v165, %v164
    %v181 = vpack.c.b16 %v167, %v166
    %v182 = vpack.c.b16 %v169, %v168
    %v183 = vpack.c.b16 %v171, %v170
    %v184 = vpack.c.b16 %v173, %v172
    %v185 = vpack.c.b16 %v175, %v174
    %v186 = vpack.c.b16 %v177, %v176
    %v187 = vpack.c.b16 %v179, %v178
    %196 = vmatprep.subr.bf16.mxu0 0
    %197 = vmatpush1.bf16.msra.mxu0 %v187
    %198 = vmatprep.subr.bf16.mxu0 0
    %199 = vmatpush1.bf16.msra.mxu0 %v186
    %200 = vmatprep.subr.bf16.mxu0 0
    %201 = vmatpush1.bf16.msra.mxu0 %v185
    %202 = vmatprep.subr.bf16.mxu0 0
    %203 = vmatpush1.bf16.msra.mxu0 %v184
    %204 = vmatprep.subr.bf16.mxu0 0
    %205 = vmatpush1.bf16.msra.mxu0 %v183
    %206 = vmatprep.subr.bf16.mxu0 0
    %207 = vmatpush1.bf16.msra.mxu0 %v182
    %208 = vmatprep.subr.bf16.mxu0 0
    %209 = vmatpush1.bf16.msra.mxu0 %v181
    %210 = vmatprep.subr.bf16.mxu0 0
    %211 = vmatpush1.bf16.msra.mxu0 %v180
    %212 = vmatprep.subr.bf16.mxu0 0
    %213 = vmatpush2.bf16.msra.mxu0 0
    %214 = vmatprep.subr.bf16.mxu0 0
    %215 = vmatpush2.bf16.msra.mxu0 0
    %216 = vmatprep.subr.bf16.mxu0 0
    %217 = vmatpush2.bf16.msra.mxu0 0
    %218 = vmatprep.subr.bf16.mxu0 0
    %219 = vmatpush2.bf16.msra.mxu0 0
    %220 = vmatprep.subr.bf16.mxu0 0
    %221 = vmatpush2.bf16.msra.mxu0 0
    %222 = vmatprep.subr.bf16.mxu0 0
    %223 = vmatpush2.bf16.msra.mxu0 0
    %224 = vmatprep.subr.bf16.mxu0 0
    %225 = vmatpush2.bf16.msra.mxu0 0
    %226 = vmatprep.subr.bf16.mxu0 0
    %227 = vmatpush2.bf16.msra.mxu0 0
    %228 = vmatprep.mubr.bf16.mxu0 0
    %229 = vmatmul.mubr.bf16.gmra.mxu0 %v124
    %v230 = vpop.f32.mrf.mxu0
    %v231 = vadd.f32 %v146, %v230
    %v232 = vpop.f32.mrf.mxu0
    %v233 = vpop.f32.mrf.mxu0
    %v234 = vadd.f32 %v146, %v233
    %v235 = vpop.f32.mrf.mxu0
    %236 = vdwg.mxu0
    %v237 = vmax.f32 %v231, 0.0
    %v238 = vmax.f32 %v234, 0.0
    %v239 = vpack.c.bf16 %v238, %v237
    %v240 = vld [vmem:[#allocation4] sm:$0xf]
    %v241 = vld [vmem:[#allocation4 + $0x4] sm:$0xf]
    %v242 = vld [vmem:[#allocation4 + $0x8] sm:$0xf]
    %v243 = vld [vmem:[#allocation4 + $0xc] sm:$0xf]
    %v244 = vld [vmem:[#allocation4 + $0x10] sm:$0xf]
    %v245 = vld [vmem:[#allocation4 + $0x14] sm:$0xf]
    %v246 = vld [vmem:[#allocation4 + $0x18] sm:$0xf]
    %v247 = vld [vmem:[#allocation4 + $0x1c] sm:$0xf]
    %v248 = vld [vmem:[#allocation4 + $0x20] sm:$0xf]
    %v249 = vld [vmem:[#allocation4 + $0x24] sm:$0xf]
    %v250 = vld [vmem:[#allocation4 + $0x28] sm:$0xf]
    %v251 = vld [vmem:[#allocation4 + $0x2c] sm:$0xf]
    %v252 = vld [vmem:[#allocation4 + $0x30] sm:$0xf]
    %v253 = vld [vmem:[#allocation4 + $0x34] sm:$0xf]
    %v254 = vld [vmem:[#allocation4 + $0x38] sm:$0xf]
    %v255 = vld [vmem:[#allocation4 + $0x3c] sm:$0xf]
    %v256 = vld [vmem:[%s6] sm:$0x1]
    %v258 = vlaneseq
    %v259 = vshrl.u32 %v258, 7
    %v260 = vsub.s32 0, %v259
    %v261 = vrot.slane %v256, %v260
    %v279 = vunpack.c.l.b16 %v240
    %v280 = vunpack.c.l.b16 %v241
    %v281 = vunpack.c.l.b16 %v242
    %v282 = vunpack.c.l.b16 %v243
    %v283 = vunpack.c.l.b16 %v244
    %v284 = vunpack.c.l.b16 %v245
    %v285 = vunpack.c.l.b16 %v246
    %v286 = vunpack.c.l.b16 %v247
    %v287 = vunpack.c.l.b16 %v248
    %v288 = vunpack.c.l.b16 %v249
    %v289 = vunpack.c.l.b16 %v250
    %v290 = vunpack.c.l.b16 %v251
    %v291 = vunpack.c.l.b16 %v252
    %v292 = vunpack.c.l.b16 %v253
    %v293 = vunpack.c.l.b16 %v254
    %v294 = vunpack.c.l.b16 %v255
    %v295 = vpack.c.b16 %v280, %v279
    %v296 = vpack.c.b16 %v282, %v281
    %v297 = vpack.c.b16 %v284, %v283
    %v298 = vpack.c.b16 %v286, %v285
    %v299 = vpack.c.b16 %v288, %v287
    %v300 = vpack.c.b16 %v290, %v289
    %v301 = vpack.c.b16 %v292, %v291
    %v302 = vpack.c.b16 %v294, %v293
    %311 = vmatprep.subr.bf16.mxu0 0
    %312 = vmatpush1.bf16.msra.mxu0 %v302
    %313 = vmatprep.subr.bf16.mxu0 0
    %314 = vmatpush1.bf16.msra.mxu0 %v301
    %315 = vmatprep.subr.bf16.mxu0 0
    %316 = vmatpush1.bf16.msra.mxu0 %v300
    %317 = vmatprep.subr.bf16.mxu0 0
    %318 = vmatpush1.bf16.msra.mxu0 %v299
    %319 = vmatprep.subr.bf16.mxu0 0
    %320 = vmatpush1.bf16.msra.mxu0 %v298
    %321 = vmatprep.subr.bf16.mxu0 0
    %322 = vmatpush1.bf16.msra.mxu0 %v297
    %323 = vmatprep.subr.bf16.mxu0 0
    %324 = vmatpush1.bf16.msra.mxu0 %v296
    %325 = vmatprep.subr.bf16.mxu0 0
    %326 = vmatpush1.bf16.msra.mxu0 %v295
    %327 = vmatprep.subr.bf16.mxu0 0
    %328 = vmatpush2.bf16.msra.mxu0 0
    %329 = vmatprep.subr.bf16.mxu0 0
    %330 = vmatpush2.bf16.msra.mxu0 0
    %331 = vmatprep.subr.bf16.mxu0 0
    %332 = vmatpush2.bf16.msra.mxu0 0
    %333 = vmatprep.subr.bf16.mxu0 0
    %334 = vmatpush2.bf16.msra.mxu0 0
    %335 = vmatprep.subr.bf16.mxu0 0
    %336 = vmatpush2.bf16.msra.mxu0 0
    %337 = vmatprep.subr.bf16.mxu0 0
    %338 = vmatpush2.bf16.msra.mxu0 0
    %339 = vmatprep.subr.bf16.mxu0 0
    %340 = vmatpush2.bf16.msra.mxu0 0
    %341 = vmatprep.subr.bf16.mxu0 0
    %342 = vmatpush2.bf16.msra.mxu0 0
    %343 = vmatprep.mubr.bf16.mxu0 0
    %344 = vmatmul.mubr.bf16.gmra.mxu0 %v239
    %v345 = vpop.f32.mrf.mxu0
    %v346 = vadd.f32 %v261, %v345
    %v347 = vpop.f32.mrf.mxu0
    %v348 = vpop.f32.mrf.mxu0
    %v349 = vadd.f32 %v261, %v348
    %v350 = vpop.f32.mrf.mxu0
    %351 = vdwg.mxu0
    %352 = vst [vmem:[%s7] sm:$0xff] %v346
    %353 = vst [vmem:[%s7 + $0x8] sm:$0xff] %v349
    // Predicated region
    $region38: #{_lambda_.1} parent=1 // pred_check
      _
    $region39: #{_lambda_.1} parent=1 // pred_check_branch
      %355 = sbr.rel (0) target = $region41
    $region40: #{_lambda_.1} parent=1 // pred_region
      _
    $region41: #{_lambda_.1} parent=1 // pred_fallthru
      _
    // Predicated region
    $region42: #{_lambda_.1} parent=1 // pred_check
      _
    $region43: #{_lambda_.1} parent=1 // pred_check_branch
      %357 = sbr.rel (0) target = $region45
    $region44: #{_lambda_.1} parent=1 // pred_region
      _
    $region45: #{_lambda_.1} parent=1 // pred_fallthru
      _
    %358 = vsyncpa [#allocation3], 1
    %359 = vsyncpa [#allocation5], 1

</llo_original>
